<compile_context>
chip_gen: v6e
topology: v6e:2x2x1
jax: 0.10.0
libtpu: 0.0.40
codegen_flags: <defaults>
</compile_context>

<pallas_src>
import functools

import jax
import jax.numpy as jnp
from jax import lax
from jax.experimental import pallas as pl
from jax.experimental.pallas import tpu as pltpu

_LANES = 128
_TARGET_BLOCK_BYTES = 8 * 1024 * 1024   # ~8 MiB per grid-step DMA, all dtypes
_NUM_SHARDS = 2                         # leading "parallel" axis (v7x: 2 TCs)


def _sn_sum_kernel(x_ref, o_ref, acc_ref, *, rows, block_rows,
                   tiles_per_shard, need_mask):
    """Per-shard partial-sum kernel over a lane-aligned (rows, 128) view.

    grid = (shard, tile).  Each shard walks `tiles_per_shard` row tiles,
    accumulating lane-wise partial sums into a private (1, 128) f32 scratch;
    the single cross-lane reduce happens in the wrapper on the tiny
    (shards, 8, 128) partials.  The shard's partial row is broadcast into its
    (1, 8, 128) output block on the last tile (full, unmasked store).
    """
    s = pl.program_id(0)
    i = pl.program_id(1)
    last = pl.num_programs(1) - 1

    @pl.when(i == 0)
    def _():
        acc_ref[...] = jnp.zeros_like(acc_ref)

    def _acc_full():
        # Fused cast-accumulate: no explicit full-tile f32 temp.
        acc_ref[...] += jnp.sum(x_ref[...], axis=0, keepdims=True,
                                dtype=jnp.float32)

    if need_mask:
        # Global tile index and number of valid rows inside this tile.
        g = s * tiles_per_shard + i
        valid = rows - g * block_rows        # <= 0: dummy; >= block_rows: full

        @pl.when(valid >= block_rows)        # common case: mask-free
        def _():
            _acc_full()

        @pl.when(jnp.logical_and(valid > 0, valid < block_rows))
        def _():
            # Ragged tile: rows past `valid` are the OOB region of a boundary
            # block (stale VMEM) and must be zeroed before summation.
            x = x_ref[...]
            row_ids = lax.broadcasted_iota(jnp.int32, x.shape, 0)
            xm = jnp.where(row_ids < valid, x, 0)
            acc_ref[...] += jnp.sum(xm, axis=0, keepdims=True,
                                    dtype=jnp.float32)
        # valid <= 0: dummy tile from shard padding -> contributes nothing.
    else:
        _acc_full()

    @pl.when(i == last)
    def _():
        # (1, 128) -> (1, 8, 128): the wrapper reads row 0 of each shard.
        o_ref[...] = jnp.broadcast_to(acc_ref[...][None], o_ref.shape)


def _round_up(x, m):
    return ((x + m - 1) // m) * m


def sn_gen_loss(neg, weight=1.0, *, block_rows=None, num_shards=None):
    """-weight * mean(neg), computed with a Pallas streaming-reduction kernel."""
    n_elems = neg.size
    assert n_elems > 0

    flat = neg.reshape(-1)            # free (metadata-only) flatten
    rem = n_elems % _LANES
    main = n_elems - rem

    # < 128-element tail: tiny plain-JAX sum, so the big array is never
    # padded / copied just for lane alignment.
    if rem:
        tail_sum = jnp.sum(flat[main:], dtype=jnp.float32)
    else:
        tail_sum = jnp.float32(0.0)

    if main == 0:
        # TODO(synk): inputs with fewer than 128 elements bypass the Pallas
        # path entirely (not worth a kernel launch).
        total = tail_sum
    else:
        rows = main // _LANES
        x2d = (flat if rem == 0 else flat[:main]).reshape(rows, _LANES)

        itemsize = jnp.dtype(neg.dtype).itemsize
        row_align = max(8, 32 // itemsize)    # 8 f32 / 16 bf16 / 32 int8-fp8
        if block_rows is None:
            # Dtype-scaled tile: keep the per-step DMA at ~8 MiB.
            block_rows = _TARGET_BLOCK_BYTES // (_LANES * itemsize)
        block_rows = min(block_rows, _round_up(rows, row_align))
        assert block_rows % row_align == 0, block_rows

        n_tiles = pl.cdiv(rows, block_rows)
        if num_shards is None:
            # 2-way TC sharding only once the (at most one) shard-padding
            # dummy tile is noise relative to the total tile count.
            num_shards = _NUM_SHARDS if n_tiles >= 8 else 1
        num_shards = max(1, min(num_shards, n_tiles))
        tiles_per_shard = pl.cdiv(n_tiles, num_shards)
        need_mask = (rows % block_rows != 0) or (
            num_shards * tiles_per_shard != n_tiles)

        def x_index_map(s, i):
            g = s * tiles_per_shard + i
            # Clamp shard-padding ("dummy") tiles onto the last real tile so
            # the pipeline DMA never walks past the array; the kernel skips
            # their contribution via the valid <= 0 mask.
            return (jnp.minimum(g, n_tiles - 1), 0)

        kernel = functools.partial(
            _sn_sum_kernel,
            rows=rows,
            block_rows=block_rows,
            tiles_per_shard=tiles_per_shard,
            need_mask=need_mask,
        )

        block_bytes = block_rows * _LANES * itemsize
        partials = pl.pallas_call(
            kernel,
            out_shape=jax.ShapeDtypeStruct((num_shards, 8, _LANES),
                                           jnp.float32),
            grid_spec=pltpu.PrefetchScalarGridSpec(
                num_scalar_prefetch=0,
                grid=(num_shards, tiles_per_shard),
                in_specs=[pl.BlockSpec((block_rows, _LANES), x_index_map)],
                out_specs=pl.BlockSpec((1, 8, _LANES),
                                       lambda s, i: (s, 0, 0)),
                scratch_shapes=[pltpu.VMEM((1, _LANES), jnp.float32)],
            ),
            compiler_params=pltpu.CompilerParams(
                # Shard axis across TensorCores (v7x); tile axis is the
                # sequential reduction.
                dimension_semantics=("parallel", "arbitrary"),
                # Double-buffered ~8 MiB input blocks exceed v5e's 16 MiB
                # scoped-VMEM default; stay well under v7x's 64 MiB physical.
                vmem_limit_bytes=int(max(2 * block_bytes + (8 << 20),
                                         32 << 20)),
            ),
            cost_estimate=pl.CostEstimate(
                flops=int(main),
                transcendentals=0,
                bytes_accessed=int(main) * int(itemsize)
                + num_shards * 8 * _LANES * 4,
            ),
        )(x2d)

        # Single tiny cross-lane reduce of the per-shard partial rows.
        total = jnp.sum(partials[:, 0, :], dtype=jnp.float32) + tail_sum

    # Scale applied outside the kernel: changing `weight` never recompiles.
    loss = -(total * weight) / n_elems
    return loss.astype(jnp.float32)


if __name__ == "__main__":
    key = jax.random.PRNGKey(0)
    k1, k2, k3 = jax.random.split(key, 3)

    # 1) Lane-aligned NCHW discriminator output -> zero-copy single-tile path.
    neg1 = jax.random.normal(k1, (2, 4, 16, 16), dtype=jnp.float32)
    loss1 = jax.block_until_ready(sn_gen_loss(neg1, weight=1.0))
    ref1 = -1.0 * jnp.mean(neg1)
    assert jnp.allclose(loss1, ref1, atol=1e-5, rtol=1e-5), (loss1, ref1)

    # 2) Non-lane-aligned f32 input, tiny blocks, forced 2 shards:
    #    exercises the ragged last row-tile mask and the 112-elem JAX tail.
    neg2 = jax.random.normal(k2, (3, 5, 20, 20), dtype=jnp.float32)  # 6000
    loss2 = jax.block_until_ready(
        sn_gen_loss(neg2, weight=2.5, block_rows=8, num_shards=2))
    ref2 = -2.5 * jnp.mean(neg2)
    assert jnp.allclose(loss2, ref2, atol=1e-5, rtol=1e-5), (loss2, ref2)

    # 3) bf16 input with an odd tile count across 2 shards: exercises the
    #    dummy-tile skip, the masked ragged tile, the fused bf16->f32
    #    accumulation and the tail path.
    neg3 = jax.random.normal(k3, (2, 3, 50, 30), dtype=jnp.bfloat16)  # 9000
    loss3 = jax.block_until_ready(
        sn_gen_loss(neg3, weight=0.5, block_rows=16, num_shards=2))
    ref3 = -0.5 * jnp.mean(neg3.astype(jnp.float32))
    assert jnp.allclose(loss3, ref3, atol=1e-4, rtol=1e-3), (loss3, ref3)

    print("KERNEL_OK")
</pallas_src>

<mosaic_0001>
module attributes {stable_mosaic.version = 11 : i64} {
  func.func @_sn_sum_kernel(%arg0: i32, %arg1: i32, %arg2: memref<16x128xf32, #tpu.memory_space<vmem>>, %arg3: memref<1x8x128xf32, #tpu.memory_space<vmem>>, %arg4: memref<1x128xf32, #tpu.memory_space<vmem>>) attributes {dimension_semantics = [#tpu.dimension_semantics<parallel>, #tpu.dimension_semantics<arbitrary>], iteration_bounds = array<i64: 1, 1>, scalar_prefetch = 0 : i64, scratch_operands = 1 : i64, tpu.core_type = #tpu.core_type<tc>, window_params = [{transform_indices = @transform_0, window_bounds = array<i64: 16, 128>}, {transform_indices = @transform_1, window_bounds = array<i64: 1, 8, 128>}]} {
    %c0_i32 = arith.constant 0 : i32
    %0 = arith.cmpi eq, %arg1, %c0_i32 : i32
    %1 = arith.extui %0 : i1 to i32
    %c0_i32_0 = arith.constant 0 : i32
    %2 = arith.cmpi ne, %1, %c0_i32_0 : i32
    scf.if %2 {
      %cst_8 = arith.constant 0.000000e+00 : f32
      %12 = vector.broadcast %cst_8 : f32 to vector<1x128xf32>
      %c0_9 = arith.constant 0 : index
      %c0_10 = arith.constant 0 : index
      %13 = vector.load %arg4[%c0_9, %c0_10] : memref<1x128xf32, #tpu.memory_space<vmem>>, vector<1x128xf32>
      tpu.vector_store %arg4[%c0_9, %c0_10], %12 {strides = array<i32>} : memref<1x128xf32, #tpu.memory_space<vmem>>, vector<1x128xf32>,
    } else {
    }
    %c0 = arith.constant 0 : index
    %c0_1 = arith.constant 0 : index
    %3 = vector.load %arg4[%c0, %c0_1] : memref<1x128xf32, #tpu.memory_space<vmem>>, vector<1x128xf32>
    %c0_2 = arith.constant 0 : index
    %c0_3 = arith.constant 0 : index
    %4 = vector.load %arg2[%c0_2, %c0_3] : memref<16x128xf32, #tpu.memory_space<vmem>>, vector<16x128xf32>
    %cst = arith.constant dense<0.000000e+00> : vector<128xf32>
    %5 = vector.multi_reduction <add>, %4, %cst [0] : vector<16x128xf32> to vector<128xf32>
    %6 = vector.shape_cast %5 : vector<128xf32> to vector<1x128xf32>
    %7 = arith.addf %3, %6 : vector<1x128xf32>
    %c0_4 = arith.constant 0 : index
    %c0_5 = arith.constant 0 : index
    %8 = vector.load %arg4[%c0_4, %c0_5] : memref<1x128xf32, #tpu.memory_space<vmem>>, vector<1x128xf32>
    tpu.vector_store %arg4[%c0_4, %c0_5], %7 {strides = array<i32>} : memref<1x128xf32, #tpu.memory_space<vmem>>, vector<1x128xf32>,
    %c0_i32_6 = arith.constant 0 : i32
    %9 = arith.cmpi eq, %arg1, %c0_i32_6 : i32
    %10 = arith.extui %9 : i1 to i32
    %c0_i32_7 = arith.constant 0 : i32
    %11 = arith.cmpi ne, %10, %c0_i32_7 : i32
    scf.if %11 {
      %c0_8 = arith.constant 0 : index
      %c0_9 = arith.constant 0 : index
      %12 = vector.load %arg4[%c0_8, %c0_9] : memref<1x128xf32, #tpu.memory_space<vmem>>, vector<1x128xf32>
      %13 = vector.shape_cast %12 : vector<1x128xf32> to vector<1x1x128xf32>
      %14 = vector.shape_cast %13 : vector<1x1x128xf32> to vector<1x1x128xf32>
      %15 = vector.broadcast %14 : vector<1x1x128xf32> to vector<1x8x128xf32>
      %c0_10 = arith.constant 0 : index
      %c0_11 = arith.constant 0 : index
      %c0_12 = arith.constant 0 : index
      %16 = vector.load %arg3[%c0_10, %c0_11, %c0_12] : memref<1x8x128xf32, #tpu.memory_space<vmem>>, vector<1x8x128xf32>
      tpu.vector_store %arg3[%c0_10, %c0_11, %c0_12], %15 {strides = array<i32>} : memref<1x8x128xf32, #tpu.memory_space<vmem>>, vector<1x8x128xf32>,
    } else {
    }
    return
  }
  func.func @transform_0(%arg0: i32, %arg1: i32) -> (i32, i32) {
    %c1_i32 = arith.constant 1 : i32
    %0 = arith.muli %arg0, %c1_i32 : i32
    %1 = arith.addi %0, %arg1 : i32
    %c0_i32 = arith.constant 0 : i32
    %2 = arith.minsi %1, %c0_i32 : i32
    %c0_i32_0 = arith.constant 0 : i32
    %c0_i32_1 = arith.constant 0 : i32
    return %2, %c0_i32_0 : i32, i32
  }
  func.func @transform_1(%arg0: i32, %arg1: i32) -> (i32, i32, i32) {
    %c0_i32 = arith.constant 0 : i32
    %c0_i32_0 = arith.constant 0 : i32
    %c0_i32_1 = arith.constant 0 : i32
    return %arg0, %c0_i32, %c0_i32_0 : i32, i32, i32
  }
}

</mosaic_0001>

<llo_original>
// kernel: tpu_custom_call.1
$region0: #{tpu_custom_call.1}
  #allocation0 [shape = 'u32[]', space=smem, size = 0x4, offset = 0x4, fixed_abs, tag = 'smem constant byte address 0x4 - core index']
  #allocation1 [shape = 'u32[144,128]{1,0:T(1,128)}', space=vmem, size = 0x12000, scoped, tag = 'internal scratch']
  #allocation2 [shape = 'f32[1,128]{1,0:T(1,128)}', space=vmem, size = 0x200, scoped, tag = 'scratch operand']
  %s0 = inlined_call_operand.hbm [shape: f32[16,128], index: 0, kind: input, shape index: {}]
  %s1 = inlined_call_operand.hbm [shape: f32[1,8,128], index: 1, kind: output, shape index: {}]
  %s2 = sld [smem:[#allocation0]]
  $region26: #{tpu_custom_call.1} parent=0
    _
  %s4 = ssub.s32 1, %s2
  %s5 = scalar_select 0, %s4, %s2
  $region1: #{tpu_custom_call.1} parent=0
    #allocation3 [shape = 'u8[8192]{0}', space=vmem, size = 0x2000, scoped, tag = 'input window, operand 0, single buffered']
    #allocation4 [shape = 's32[1]{0}', space=sflag, size = 0x4, scoped, tag = 'scoped memory for tpu_custom_call.1']
    #allocation5 [shape = 's32[1]{0}', space=sflag, size = 0x4, scoped, tag = 'scoped memory for tpu_custom_call.1']
    #allocation6 [shape = 'u8[4096]{0}', space=vmem, size = 0x1000, scoped, tag = 'output window, operand 0, single buffered']
    %6 = vsyncpa [#allocation4], 0
    %7 = vsyncpa [#allocation5], 0
    // Predicated region
    $region2: #{tpu_custom_call.1} parent=1 // pred_check
      _
    $region3: #{tpu_custom_call.1} parent=1 // pred_check_branch
      %9 = sbr.rel (0) target = $region5
    $region4: #{tpu_custom_call.1} parent=1 // pred_region
      %s10 = sadd.s32 0, 0
      %p11 = scmp.lt.s32.totalorder %s10, 0
      %s12 = scalar_select %p11, %s10, 0
      %s13 = smul.u32 2, %s12
      %s15 = ssub.s32 256, 256
      %16 = vsyncadd [#allocation4], %s15
      %s17 = smul.addr %s13, 128
      %s18 = scalar_lea.hbm %s0, %s17
      %s19 = sshll.u32 [#allocation3], 4
      %s20 = int_to_ptr.vmem [resolvable:$true] %s19
      %25 = dma.hbm_to_vmem [thread:$0]  %s18, 256, %s20, [#allocation4], 128, 128, 8
    $region5: #{tpu_custom_call.1} parent=1 // pred_fallthru
      _
    // Predicated region
    $region6: #{tpu_custom_call.1} parent=1 // pred_check
      _
    $region7: #{tpu_custom_call.1} parent=1 // pred_check_branch
      %27 = sbr.rel (0) target = $region9
    $region8: #{tpu_custom_call.1} parent=1 // pred_region
      %28 = dma.done [#allocation4], 256
    $region9: #{tpu_custom_call.1} parent=1 // pred_fallthru
      _
    %s29 = sadd.s32 0, 0
    %p30 = scmp.lt.s32.totalorder %s29, 0
    %s31 = scalar_select %p30, %s29, 0
    %s32 = smul.u32 2, %s31
    %p33 = scmp.eq.s32.totalorder 0, 0
    // Predicated region
    $region10: #{tpu_custom_call.1} parent=1 // pred_check
      %p34 = pneg %p33
    $region11: #{tpu_custom_call.1} parent=1 // pred_check_branch
      %36 = sbr.rel (%p34) target = $region13
    $region12: #{tpu_custom_call.1} parent=1 // pred_region
      %37 = vst [vmem:[#allocation2] sm:$0x1] 0.0
    $region13: #{tpu_custom_call.1} parent=1 // pred_fallthru
      _
    %v38 = vld [vmem:[#allocation2] sm:$0x1]
    %v39 = vld [vmem:[#allocation3] sm:$0xff]
    %v40 = vld [vmem:[#allocation3 + $0x8] sm:$0xff]
    %v41 = vadd.f32 %v39, %v40
    %v42 = vrot.slane %v41, 4
    %v43 = vadd.f32 %v41, %v42
    %v44 = vrot.slane %v43, 2
    %v45 = vadd.f32 %v43, %v44
    %v46 = vrot.slane %v45, 1
    %v47 = vadd.f32 %v45, %v46
    %v48 = vadd.f32 %v38, %v47
    %49 = vst [vmem:[#allocation2] sm:$0x1] %v48
    // Predicated region
    $region14: #{tpu_custom_call.1} parent=1 // pred_check
      %p50 = pneg %p33
    $region15: #{tpu_custom_call.1} parent=1 // pred_check_branch
      %52 = sbr.rel (%p50) target = $region17
    $region16: #{tpu_custom_call.1} parent=1 // pred_region
      %v53 = vld [vmem:[#allocation2] sm:$0x1]
      %v55 = vlaneseq
      %v56 = vshrl.u32 %v55, 7
      %v57 = vsub.s32 0, %v56
      %v58 = vrot.slane %v53, %v57
      %60 = vst [vmem:[#allocation6] sm:$0xff] %v58
    $region17: #{tpu_custom_call.1} parent=1 // pred_fallthru
      _
    // Predicated region
    $region18: #{tpu_custom_call.1} parent=1 // pred_check
      _
    $region19: #{tpu_custom_call.1} parent=1 // pred_check_branch
      %62 = sbr.rel (0) target = $region21
    $region20: #{tpu_custom_call.1} parent=1 // pred_region
      %s64 = ssub.s32 128, 128
      %65 = vsyncadd [#allocation5], %s64
      %s67 = sshll.u32 [#allocation6], 4
      %s68 = int_to_ptr.vmem [resolvable:$true] %s67
      %70 = dma.vmem_to_hbm [thread:$0]  %s68, 128, %s1, [#allocation5]
    $region21: #{tpu_custom_call.1} parent=1 // pred_fallthru
      _
    // Predicated region
    $region22: #{tpu_custom_call.1} parent=1 // pred_check
      _
    $region23: #{tpu_custom_call.1} parent=1 // pred_check_branch
      %72 = sbr.rel (0) target = $region25
    $region24: #{tpu_custom_call.1} parent=1 // pred_region
      %73 = dma.done [#allocation5], 128
    $region25: #{tpu_custom_call.1} parent=1 // pred_fallthru
      _
    %74 = vsyncpa [#allocation4], 1
    %75 = vsyncpa [#allocation5], 1

</llo_original>
